<compile_context>
chip_gen: v6e
topology: v6e:2x2x1
jax: 0.10.0
libtpu: 0.0.40
codegen_flags: <defaults>
</compile_context>

<pallas_src>
import jax
import jax.numpy as jnp
from jax.experimental import pallas as pl
from jax.experimental.pallas import tpu as pltpu


def linear_kernel(x_ref, w_ref, b_ref, o_ref):
    # x_ref: (TB, K), w_ref: (K, N), b_ref: (1, N), o_ref: (TB, N)
    acc = jnp.dot(x_ref[...], w_ref[...], preferred_element_type=jnp.float32)
    # Bias add in f32 (acc is f32 already); single cast at the store.
    o_ref[...] = (acc + b_ref[...].astype(jnp.float32)).astype(o_ref.dtype)


def _round_up(n, m):
    return ((n + m - 1) // m) * m


def linear_pallas(x, w_t, b, *, small_tb=512, big_tb=4096):
    """y = x @ w_t + b, with x:(B,K), w_t:(K,N), b:(N,)."""
    B, K = x.shape
    Kw, N = w_t.shape
    assert K == Kw, f"in_features mismatch: {K} vs {Kw}"
    b2d = b.reshape(1, N)

    # dtype-aware sublane granularity: f32 packs 8 rows / vreg, bf16 16, int8/fp8 32.
    itemsize = jnp.dtype(x.dtype).itemsize
    sublane = {4: 8, 2: 16, 1: 32}.get(itemsize, 8)

    if B <= small_tb:
        # Latency-bound regime: a single block / 1-step grid -> no pipeline
        # prologue/epilogue or double-buffer churn for a one-MXU-push problem.
        tb = max(sublane, _round_up(B, sublane))
    else:
        # HBM-bound regime: big row tiles (multiple of 128), capped so the grid
        # keeps >= 2 steps -> megacore sharding on v7x uses both TensorCores.
        tb = min(big_tb, _round_up(pl.cdiv(B, 2), 128))
    grid = (pl.cdiv(B, tb),)  # uneven last block: stores are masked, reads row-independent

    cost = pl.CostEstimate(
        flops=2 * B * K * N,
        transcendentals=0,
        bytes_accessed=(B * K * itemsize                           # x
                        + K * N * jnp.dtype(w_t.dtype).itemsize    # w
                        + N * jnp.dtype(b.dtype).itemsize          # b
                        + B * N * itemsize),                       # y
    )

    def make_call(single_buffer_consts):
        const_kw = dict(pipeline_mode=pl.Buffered(1)) if single_buffer_consts else {}
        return pl.pallas_call(
            linear_kernel,
            out_shape=jax.ShapeDtypeStruct((B, N), x.dtype),
            grid_spec=pltpu.PrefetchScalarGridSpec(
                num_scalar_prefetch=0,
                grid=grid,
                in_specs=[
                    pl.BlockSpec((tb, K), lambda i: (i, 0)),
                    pl.BlockSpec((K, N), lambda i: (0, 0), **const_kw),  # weight VMEM-resident
                    pl.BlockSpec((1, N), lambda i: (0, 0), **const_kw),  # bias VMEM-resident
                ],
                out_specs=pl.BlockSpec((tb, N), lambda i: (i, 0)),
            ),
            compiler_params=pltpu.CompilerParams(
                dimension_semantics=("parallel",),
            ),
            cost_estimate=cost,
        )

    try:
        return make_call(True)(x, w_t, b2d)
    except Exception:
        # pipeline_mode=pl.Buffered(1) unsupported on this path -> default
        # double-buffering; only costs an extra 64 KiB weight buffer.
        return make_call(False)(x, w_t, b2d)


if __name__ == "__main__":
    key = jax.random.PRNGKey(0)
    kx, kw, kb, kx2 = jax.random.split(key, 4)

    IN, OUT = 128, 128

    # Deterministic parameter init (mimics nn.Linear uniform(-1/sqrt(in), 1/sqrt(in)))
    bound = 1.0 / jnp.sqrt(jnp.float32(IN))
    weight = jax.random.uniform(kw, (OUT, IN), jnp.float32, -bound, bound)  # torch (out, in)
    bias = jax.random.uniform(kb, (OUT,), jnp.float32, -bound, bound)

    # --- Small batch (single-block path), f32 ---
    B = 8
    x = jax.random.normal(kx, (B, IN), jnp.float32)
    y = jax.block_until_ready(linear_pallas(x, weight.T, bias))
    y_ref = x @ weight.T + bias
    assert jnp.allclose(y, y_ref, atol=1e-5, rtol=1e-5), "f32 small-batch mismatch"

    # --- Ragged larger batch (uneven grid, >= 2 parallel steps), f32 ---
    B2 = 700
    x2 = jax.random.normal(kx2, (B2, IN), jnp.float32)
    y2 = jax.block_until_ready(linear_pallas(x2, weight.T, bias))
    y2_ref = x2 @ weight.T + bias
    assert y2.shape == (B2, OUT)
    assert jnp.allclose(y2, y2_ref, atol=1e-5, rtol=1e-5), "f32 ragged-batch mismatch"

    # --- bf16 operands, small batch (16-row sublane-aligned block), f32 accumulate ---
    x_bf = x.astype(jnp.bfloat16)
    w_bf = weight.T.astype(jnp.bfloat16)
    b_bf = bias.astype(jnp.bfloat16)
    y_bf = jax.block_until_ready(linear_pallas(x_bf, w_bf, b_bf))
    assert jnp.allclose(y_bf.astype(jnp.float32), y_ref, atol=5e-2, rtol=5e-2), \
        "bf16 small-batch mismatch"

    # --- bf16 operands, ragged batch (uneven grid path) ---
    x2_bf = x2.astype(jnp.bfloat16)
    y2_bf = jax.block_until_ready(linear_pallas(x2_bf, w_bf, b_bf))
    assert y2_bf.shape == (B2, OUT)
    assert jnp.allclose(y2_bf.astype(jnp.float32), y2_ref, atol=5e-2, rtol=5e-2), \
        "bf16 ragged-batch mismatch"

    print("KERNEL_OK")
</pallas_src>

<mosaic_0001>
module attributes {stable_mosaic.version = 11 : i64} {
  func.func @linear_kernel(%arg0: i32, %arg1: memref<8x128xf32, #tpu.memory_space<vmem>>, %arg2: memref<128x128xf32, #tpu.memory_space<vmem>>, %arg3: memref<1x128xf32, #tpu.memory_space<vmem>>, %arg4: memref<8x128xf32, #tpu.memory_space<vmem>>) attributes {dimension_semantics = [#tpu.dimension_semantics<parallel>], iteration_bounds = array<i64: 1>, scalar_prefetch = 0 : i64, scratch_operands = 0 : i64, tpu.core_type = #tpu.core_type<tc>, window_params = [{transform_indices = @transform_0, window_bounds = array<i64: 8, 128>}, {pipeline_mode = #tpu.pipeline_mode<synchronous>, transform_indices = @transform_1, window_bounds = array<i64: 128, 128>}, {pipeline_mode = #tpu.pipeline_mode<synchronous>, transform_indices = @transform_2, window_bounds = array<i64: 1, 128>}, {transform_indices = @transform_3, window_bounds = array<i64: 8, 128>}]} {
    %c0 = arith.constant 0 : index
    %c0_0 = arith.constant 0 : index
    %0 = vector.load %arg1[%c0, %c0_0] : memref<8x128xf32, #tpu.memory_space<vmem>>, vector<8x128xf32>
    %c0_1 = arith.constant 0 : index
    %c0_2 = arith.constant 0 : index
    %1 = vector.load %arg2[%c0_1, %c0_2] : memref<128x128xf32, #tpu.memory_space<vmem>>, vector<128x128xf32>
    %cst = arith.constant dense<0.000000e+00> : vector<8x128xf32>
    %2 = tpu.matmul %0, %1, %cst {dimension_numbers = #tpu.dot_dimension_numbers<[1], [0], [0], [1], [0, 0, 1, 1], [], []>} : vector<8x128xf32>, vector<128x128xf32>, vector<8x128xf32> -> vector<8x128xf32>
    %c0_3 = arith.constant 0 : index
    %c0_4 = arith.constant 0 : index
    %3 = vector.load %arg3[%c0_3, %c0_4] : memref<1x128xf32, #tpu.memory_space<vmem>>, vector<1x128xf32>
    %4 = vector.broadcast %3 : vector<1x128xf32> to vector<8x128xf32>
    %5 = arith.addf %2, %4 : vector<8x128xf32>
    %c0_5 = arith.constant 0 : index
    %c0_6 = arith.constant 0 : index
    %6 = vector.load %arg4[%c0_5, %c0_6] : memref<8x128xf32, #tpu.memory_space<vmem>>, vector<8x128xf32>
    tpu.vector_store %arg4[%c0_5, %c0_6], %5 {strides = array<i32>} : memref<8x128xf32, #tpu.memory_space<vmem>>, vector<8x128xf32>,
    return
  }
  func.func @transform_0(%arg0: i32) -> (i32, i32) {
    %c0_i32 = arith.constant 0 : i32
    %c0_i32_0 = arith.constant 0 : i32
    return %arg0, %c0_i32 : i32, i32
  }
  func.func @transform_1(%arg0: i32) -> (i32, i32) {
    %c0_i32 = arith.constant 0 : i32
    %c0_i32_0 = arith.constant 0 : i32
    %c0_i32_1 = arith.constant 0 : i32
    return %c0_i32, %c0_i32_0 : i32, i32
  }
  func.func @transform_2(%arg0: i32) -> (i32, i32) {
    %c0_i32 = arith.constant 0 : i32
    %c0_i32_0 = arith.constant 0 : i32
    %c0_i32_1 = arith.constant 0 : i32
    return %c0_i32, %c0_i32_0 : i32, i32
  }
  func.func @transform_3(%arg0: i32) -> (i32, i32) {
    %c0_i32 = arith.constant 0 : i32
    %c0_i32_0 = arith.constant 0 : i32
    return %arg0, %c0_i32 : i32, i32
  }
}

module attributes {stable_mosaic.version = 11 : i64} {
  func.func @linear_kernel(%arg0: i32, %arg1: memref<8x128xf32, #tpu.memory_space<vmem>>, %arg2: memref<128x128xf32, #tpu.memory_space<vmem>>, %arg3: memref<1x128xf32, #tpu.memory_space<vmem>>, %arg4: memref<8x128xf32, #tpu.memory_space<vmem>>) attributes {dimension_semantics = [#tpu.dimension_semantics<parallel>], iteration_bounds = array<i64: 1>, scalar_prefetch = 0 : i64, scratch_operands = 0 : i64, tpu.core_type = #tpu.core_type<tc>, window_params = [{transform_indices = @transform_0, window_bounds = array<i64: 8, 128>}, {pipeline_mode = #tpu.pipeline_mode<synchronous>, transform_indices = @transform_1, window_bounds = array<i64: 128, 128>}, {pipeline_mode = #tpu.pipeline_mode<synchronous>, transform_indices = @transform_2, window_bounds = array<i64: 1, 128>}, {transform_indices = @transform_3, window_bounds = array<i64: 8, 128>}]} {
    %c0 = arith.constant 0 : index
    %c0_0 = arith.constant 0 : index
    %0 = vector.load %arg1[%c0, %c0_0] : memref<8x128xf32, #tpu.memory_space<vmem>>, vector<8x128xf32>
    %c0_1 = arith.constant 0 : index
    %c0_2 = arith.constant 0 : index
    %1 = vector.load %arg2[%c0_1, %c0_2] : memref<128x128xf32, #tpu.memory_space<vmem>>, vector<128x128xf32>
    %cst = arith.constant dense<0.000000e+00> : vector<8x128xf32>
    %2 = tpu.matmul %0, %1, %cst {dimension_numbers = #tpu.dot_dimension_numbers<[1], [0], [0], [1], [0, 0, 1, 1], [], []>} : vector<8x128xf32>, vector<128x128xf32>, vector<8x128xf32> -> vector<8x128xf32>
    %c0_3 = arith.constant 0 : index
    %c0_4 = arith.constant 0 : index
    %3 = vector.load %arg3[%c0_3, %c0_4] : memref<1x128xf32, #tpu.memory_space<vmem>>, vector<1x128xf32>
    %4 = vector.broadcast %3 : vector<1x128xf32> to vector<8x128xf32>
    %5 = arith.addf %2, %4 : vector<8x128xf32>
    %c0_5 = arith.constant 0 : index
    %c0_6 = arith.constant 0 : index
    %6 = vector.load %arg4[%c0_5, %c0_6] : memref<8x128xf32, #tpu.memory_space<vmem>>, vector<8x128xf32>
    tpu.vector_store %arg4[%c0_5, %c0_6], %5 {strides = array<i32>} : memref<8x128xf32, #tpu.memory_space<vmem>>, vector<8x128xf32>,
    return
  }
  func.func @transform_0(%arg0: i32) -> (i32, i32) {
    %c0_i32 = arith.constant 0 : i32
    %c0_i32_0 = arith.constant 0 : i32
    return %arg0, %c0_i32 : i32, i32
  }
  func.func @transform_1(%arg0: i32) -> (i32, i32) {
    %c0_i32 = arith.constant 0 : i32
    %c0_i32_0 = arith.constant 0 : i32
    %c0_i32_1 = arith.constant 0 : i32
    return %c0_i32, %c0_i32_0 : i32, i32
  }
  func.func @transform_2(%arg0: i32) -> (i32, i32) {
    %c0_i32 = arith.constant 0 : i32
    %c0_i32_0 = arith.constant 0 : i32
    %c0_i32_1 = arith.constant 0 : i32
    return %c0_i32, %c0_i32_0 : i32, i32
  }
  func.func @transform_3(%arg0: i32) -> (i32, i32) {
    %c0_i32 = arith.constant 0 : i32
    %c0_i32_0 = arith.constant 0 : i32
    return %arg0, %c0_i32 : i32, i32
  }
}

</mosaic_0001>

<llo_original>
// kernel: tpu_custom_call.1
$region0: #{tpu_custom_call.1}
  #allocation0 [shape = 'u32[]', space=smem, size = 0x4, offset = 0x4, fixed_abs, tag = 'smem constant byte address 0x4 - core index']
  #allocation1 [shape = 'u32[144,128]{1,0:T(1,128)}', space=vmem, size = 0x12000, scoped, tag = 'internal scratch']
  %s0 = inlined_call_operand.hbm [shape: f32[8,128], index: 0, kind: input, shape index: {}]
  %s1 = inlined_call_operand.hbm [shape: f32[128,128], index: 1, kind: input, shape index: {}]
  %s2 = inlined_call_operand.vmem [shape: f32[1,128], index: 2, kind: input, shape index: {}]
  %s3 = inlined_call_operand.hbm [shape: f32[8,128], index: 3, kind: output, shape index: {}]
  %s4 = sld [smem:[#allocation0]]
  $region30: #{tpu_custom_call.1} parent=0
    _
  %s6 = ssub.s32 1, %s4
  %s7 = scalar_select 0, %s6, %s4
  $region1: #{tpu_custom_call.1} parent=0
    #allocation2 [shape = 'u8[4096]{0}', space=vmem, size = 0x1000, scoped, tag = 'input window, operand 0, single buffered']
    #allocation3 [shape = 's32[1]{0}', space=sflag, size = 0x4, scoped, tag = 'scoped memory for tpu_custom_call.1']
    #allocation4 [shape = 's32[1]{0}', space=sflag, size = 0x4, scoped, tag = 'scoped memory for tpu_custom_call.1']
    #allocation5 [shape = 'u8[65536]{0}', space=vmem, size = 0x10000, scoped, tag = 'input window, operand 1, single buffered']
    #allocation6 [shape = 's32[1]{0}', space=sflag, size = 0x4, scoped, tag = 'scoped memory for tpu_custom_call.1']
    #allocation7 [shape = 'u8[4096]{0}', space=vmem, size = 0x1000, scoped, tag = 'output window, operand 0, single buffered']
    %8 = vsyncpa [#allocation3], 0
    %9 = vsyncpa [#allocation6], 0
    %10 = vsyncpa [#allocation4], 0
    // Predicated region
    $region2: #{tpu_custom_call.1} parent=1 // pred_check
      _
    $region3: #{tpu_custom_call.1} parent=1 // pred_check_branch
      %12 = sbr.rel (0) target = $region5
    $region4: #{tpu_custom_call.1} parent=1 // pred_region
      %s14 = ssub.s32 128, 128
      %15 = vsyncadd [#allocation3], %s14
      %s17 = sshll.u32 [#allocation2], 4
      %s18 = int_to_ptr.vmem [resolvable:$true] %s17
      %20 = dma.hbm_to_vmem [thread:$0]  %s0, 128, %s18, [#allocation3]
    $region5: #{tpu_custom_call.1} parent=1 // pred_fallthru
      _
    // Predicated region
    $region6: #{tpu_custom_call.1} parent=1 // pred_check
      _
    $region7: #{tpu_custom_call.1} parent=1 // pred_check_branch
      %22 = sbr.rel (0) target = $region9
    $region8: #{tpu_custom_call.1} parent=1 // pred_region
      %s24 = ssub.s32 2048, 2048
      %25 = vsyncadd [#allocation6], %s24
      %s26 = sshll.u32 [#allocation5], 4
      %s27 = int_to_ptr.vmem [resolvable:$true] %s26
      %32 = dma.hbm_to_vmem [thread:$0]  %s1, 2048, %s27, [#allocation6], 128, 128, 8
    $region9: #{tpu_custom_call.1} parent=1 // pred_fallthru
      _
    // Predicated region
    $region10: #{tpu_custom_call.1} parent=1 // pred_check
      _
    $region11: #{tpu_custom_call.1} parent=1 // pred_check_branch
      %34 = sbr.rel (0) target = $region13
    $region12: #{tpu_custom_call.1} parent=1 // pred_region
      _
    $region13: #{tpu_custom_call.1} parent=1 // pred_fallthru
      _
    // Predicated region
    $region14: #{tpu_custom_call.1} parent=1 // pred_check
      _
    $region15: #{tpu_custom_call.1} parent=1 // pred_check_branch
      %36 = sbr.rel (0) target = $region17
    $region16: #{tpu_custom_call.1} parent=1 // pred_region
      %37 = dma.done [#allocation3], 128
    $region17: #{tpu_custom_call.1} parent=1 // pred_fallthru
      _
    // Predicated region
    $region18: #{tpu_custom_call.1} parent=1 // pred_check
      _
    $region19: #{tpu_custom_call.1} parent=1 // pred_check_branch
      %39 = sbr.rel (0) target = $region21
    $region20: #{tpu_custom_call.1} parent=1 // pred_region
      %40 = dma.done [#allocation6], 2048
    $region21: #{tpu_custom_call.1} parent=1 // pred_fallthru
      _
    %v41 = vld [vmem:[#allocation2] sm:$0xff]
    %v42 = vld [vmem:[#allocation5] sm:$0xff]
    %v43 = vld [vmem:[#allocation5 + $0x8] sm:$0xff]
    %v44 = vld [vmem:[#allocation5 + $0x10] sm:$0xff]
    %v45 = vld [vmem:[#allocation5 + $0x18] sm:$0xff]
    %v46 = vld [vmem:[#allocation5 + $0x20] sm:$0xff]
    %v47 = vld [vmem:[#allocation5 + $0x28] sm:$0xff]
    %v48 = vld [vmem:[#allocation5 + $0x30] sm:$0xff]
    %v49 = vld [vmem:[#allocation5 + $0x38] sm:$0xff]
    %v50 = vld [vmem:[#allocation5 + $0x40] sm:$0xff]
    %v51 = vld [vmem:[#allocation5 + $0x48] sm:$0xff]
    %v52 = vld [vmem:[#allocation5 + $0x50] sm:$0xff]
    %v53 = vld [vmem:[#allocation5 + $0x58] sm:$0xff]
    %v54 = vld [vmem:[#allocation5 + $0x60] sm:$0xff]
    %v55 = vld [vmem:[#allocation5 + $0x68] sm:$0xff]
    %v56 = vld [vmem:[#allocation5 + $0x70] sm:$0xff]
    %v57 = vld [vmem:[#allocation5 + $0x78] sm:$0xff]
    %v58 = vld [vmem:[%s2] sm:$0x1]
    %v60 = vlaneseq
    %v61 = vshrl.u32 %v60, 7
    %v62 = vsub.s32 0, %v61
    %v63 = vrot.slane %v58, %v62
    %65 = vmatprep.subr.mxu0 0.0
    %66 = vmatpush1.msra.mxu0 %v57
    %67 = vmatprep.subr.mxu0 0.0
    %68 = vmatpush1.msra.mxu0 %v56
    %69 = vmatprep.subr.mxu0 0.0
    %70 = vmatpush1.msra.mxu0 %v55
    %71 = vmatprep.subr.mxu0 0.0
    %72 = vmatpush1.msra.mxu0 %v54
    %73 = vmatprep.subr.mxu0 0.0
    %74 = vmatpush1.msra.mxu0 %v53
    %75 = vmatprep.subr.mxu0 0.0
    %76 = vmatpush1.msra.mxu0 %v52
    %77 = vmatprep.subr.mxu0 0.0
    %78 = vmatpush1.msra.mxu0 %v51
    %79 = vmatprep.subr.mxu0 0.0
    %80 = vmatpush1.msra.mxu0 %v50
    %81 = vmatprep.subr.mxu0 0.0
    %82 = vmatpush1.msra.mxu0 %v49
    %83 = vmatprep.subr.mxu0 0.0
    %84 = vmatpush1.msra.mxu0 %v48
    %85 = vmatprep.subr.mxu0 0.0
    %86 = vmatpush1.msra.mxu0 %v47
    %87 = vmatprep.subr.mxu0 0.0
    %88 = vmatpush1.msra.mxu0 %v46
    %89 = vmatprep.subr.mxu0 0.0
    %90 = vmatpush1.msra.mxu0 %v45
    %91 = vmatprep.subr.mxu0 0.0
    %92 = vmatpush1.msra.mxu0 %v44
    %93 = vmatprep.subr.mxu0 0.0
    %94 = vmatpush1.msra.mxu0 %v43
    %95 = vmatprep.subr.mxu0 0.0
    %96 = vmatpush1.msra.mxu0 %v42
    %97 = vmatprep.subr.mxu0 0.0
    %98 = vmatpush2.msra.mxu0 0.0
    %99 = vmatprep.subr.mxu0 0.0
    %100 = vmatpush2.msra.mxu0 0.0
    %101 = vmatprep.subr.mxu0 0.0
    %102 = vmatpush2.msra.mxu0 0.0
    %103 = vmatprep.subr.mxu0 0.0
    %104 = vmatpush2.msra.mxu0 0.0
    %105 = vmatprep.subr.mxu0 0.0
    %106 = vmatpush2.msra.mxu0 0.0
    %107 = vmatprep.subr.mxu0 0.0
    %108 = vmatpush2.msra.mxu0 0.0
    %109 = vmatprep.subr.mxu0 0.0
    %110 = vmatpush2.msra.mxu0 0.0
    %111 = vmatprep.subr.mxu0 0.0
    %112 = vmatpush2.msra.mxu0 0.0
    %113 = vmatprep.subr.mxu0 0.0
    %114 = vmatpush2.msra.mxu0 0.0
    %115 = vmatprep.subr.mxu0 0.0
    %116 = vmatpush2.msra.mxu0 0.0
    %117 = vmatprep.subr.mxu0 0.0
    %118 = vmatpush2.msra.mxu0 0.0
    %119 = vmatprep.subr.mxu0 0.0
    %120 = vmatpush2.msra.mxu0 0.0
    %121 = vmatprep.subr.mxu0 0.0
    %122 = vmatpush2.msra.mxu0 0.0
    %123 = vmatprep.subr.mxu0 0.0
    %124 = vmatpush2.msra.mxu0 0.0
    %125 = vmatprep.subr.mxu0 0.0
    %126 = vmatpush2.msra.mxu0 0.0
    %127 = vmatprep.subr.mxu0 0.0
    %128 = vmatpush2.msra.mxu0 0.0
    %129 = vmatprep.mubr.f32.mxu0 0.0
    %130 = vmatmul.mubr.f32.gmra.mxu0 %v41
    %v131 = vpop.f32.mrf.mxu0
    %v132 = vadd.f32 %v63, %v131
    %v133 = vpop.f32.mrf.mxu0
    %134 = vdwg.mxu0
    %135 = vst [vmem:[#allocation7] sm:$0xff] %v132
    // Predicated region
    $region22: #{tpu_custom_call.1} parent=1 // pred_check
      _
    $region23: #{tpu_custom_call.1} parent=1 // pred_check_branch
      %137 = sbr.rel (0) target = $region25
    $region24: #{tpu_custom_call.1} parent=1 // pred_region
      %s139 = ssub.s32 128, 128
      %140 = vsyncadd [#allocation4], %s139
      %s142 = sshll.u32 [#allocation7], 4
      %s143 = int_to_ptr.vmem [resolvable:$true] %s142
      %145 = dma.vmem_to_hbm [thread:$0]  %s143, 128, %s3, [#allocation4]
    $region25: #{tpu_custom_call.1} parent=1 // pred_fallthru
      _
    // Predicated region
    $region26: #{tpu_custom_call.1} parent=1 // pred_check
      _
    $region27: #{tpu_custom_call.1} parent=1 // pred_check_branch
      %147 = sbr.rel (0) target = $region29
    $region28: #{tpu_custom_call.1} parent=1 // pred_region
      %148 = dma.done [#allocation4], 128
    $region29: #{tpu_custom_call.1} parent=1 // pred_fallthru
      _
    %149 = vsyncpa [#allocation3], 1
    %150 = vsyncpa [#allocation6], 1
    %151 = vsyncpa [#allocation4], 1

// kernel: tpu_custom_call.1
$region0: #{tpu_custom_call.1}
  #allocation0 [shape = 'u32[]', space=smem, size = 0x4, offset = 0x4, fixed_abs, tag = 'smem constant byte address 0x4 - core index']
  #allocation1 [shape = 'u32[144,128]{1,0:T(1,128)}', space=vmem, size = 0x12000, scoped, tag = 'internal scratch']
  %s0 = inlined_call_operand.hbm [shape: f32[8,128], index: 0, kind: input, shape index: {}]
  %s1 = inlined_call_operand.hbm [shape: f32[128,128], index: 1, kind: input, shape index: {}]
  %s2 = inlined_call_operand.vmem [shape: f32[1,128], index: 2, kind: input, shape index: {}]
  %s3 = inlined_call_operand.hbm [shape: f32[8,128], index: 3, kind: output, shape index: {}]
  %s4 = sld [smem:[#allocation0]]
  $region30: #{tpu_custom_call.1} parent=0
    _
  %s6 = ssub.s32 1, %s4
  %s7 = scalar_select 0, %s6, %s4
  $region1: #{tpu_custom_call.1} parent=0
    #allocation2 [shape = 'u8[4096]{0}', space=vmem, size = 0x1000, scoped, tag = 'input window, operand 0, single buffered']
    #allocation3 [shape = 's32[1]{0}', space=sflag, size = 0x4, scoped, tag = 'scoped memory for tpu_custom_call.1']
    #allocation4 [shape = 's32[1]{0}', space=sflag, size = 0x4, scoped, tag = 'scoped memory for tpu_custom_call.1']
    #allocation5 [shape = 'u8[65536]{0}', space=vmem, size = 0x10000, scoped, tag = 'input window, operand 1, single buffered']
    #allocation6 [shape = 's32[1]{0}', space=sflag, size = 0x4, scoped, tag = 'scoped memory for tpu_custom_call.1']
    #allocation7 [shape = 'u8[4096]{0}', space=vmem, size = 0x1000, scoped, tag = 'output window, operand 0, single buffered']
    %8 = vsyncpa [#allocation3], 0
    %9 = vsyncpa [#allocation6], 0
    %10 = vsyncpa [#allocation4], 0
    // Predicated region
    $region2: #{tpu_custom_call.1} parent=1 // pred_check
      _
    $region3: #{tpu_custom_call.1} parent=1 // pred_check_branch
      %12 = sbr.rel (0) target = $region5
    $region4: #{tpu_custom_call.1} parent=1 // pred_region
      %s14 = ssub.s32 128, 128
      %15 = vsyncadd [#allocation3], %s14
      %s17 = sshll.u32 [#allocation2], 4
      %s18 = int_to_ptr.vmem [resolvable:$true] %s17
      %20 = dma.hbm_to_vmem [thread:$0]  %s0, 128, %s18, [#allocation3]
    $region5: #{tpu_custom_call.1} parent=1 // pred_fallthru
      _
    // Predicated region
    $region6: #{tpu_custom_call.1} parent=1 // pred_check
      _
    $region7: #{tpu_custom_call.1} parent=1 // pred_check_branch
      %22 = sbr.rel (0) target = $region9
    $region8: #{tpu_custom_call.1} parent=1 // pred_region
      %s24 = ssub.s32 2048, 2048
      %25 = vsyncadd [#allocation6], %s24
      %s26 = sshll.u32 [#allocation5], 4
      %s27 = int_to_ptr.vmem [resolvable:$true] %s26
      %32 = dma.hbm_to_vmem [thread:$0]  %s1, 2048, %s27, [#allocation6], 128, 128, 8
    $region9: #{tpu_custom_call.1} parent=1 // pred_fallthru
      _
    // Predicated region
    $region10: #{tpu_custom_call.1} parent=1 // pred_check
      _
    $region11: #{tpu_custom_call.1} parent=1 // pred_check_branch
      %34 = sbr.rel (0) target = $region13
    $region12: #{tpu_custom_call.1} parent=1 // pred_region
      _
    $region13: #{tpu_custom_call.1} parent=1 // pred_fallthru
      _
    // Predicated region
    $region14: #{tpu_custom_call.1} parent=1 // pred_check
      _
    $region15: #{tpu_custom_call.1} parent=1 // pred_check_branch
      %36 = sbr.rel (0) target = $region17
    $region16: #{tpu_custom_call.1} parent=1 // pred_region
      %37 = dma.done [#allocation3], 128
    $region17: #{tpu_custom_call.1} parent=1 // pred_fallthru
      _
    // Predicated region
    $region18: #{tpu_custom_call.1} parent=1 // pred_check
      _
    $region19: #{tpu_custom_call.1} parent=1 // pred_check_branch
      %39 = sbr.rel (0) target = $region21
    $region20: #{tpu_custom_call.1} parent=1 // pred_region
      %40 = dma.done [#allocation6], 2048
    $region21: #{tpu_custom_call.1} parent=1 // pred_fallthru
      _
    %v41 = vld [vmem:[#allocation2] sm:$0xff]
    %v42 = vld [vmem:[#allocation5] sm:$0xff]
    %v43 = vld [vmem:[#allocation5 + $0x8] sm:$0xff]
    %v44 = vld [vmem:[#allocation5 + $0x10] sm:$0xff]
    %v45 = vld [vmem:[#allocation5 + $0x18] sm:$0xff]
    %v46 = vld [vmem:[#allocation5 + $0x20] sm:$0xff]
    %v47 = vld [vmem:[#allocation5 + $0x28] sm:$0xff]
    %v48 = vld [vmem:[#allocation5 + $0x30] sm:$0xff]
    %v49 = vld [vmem:[#allocation5 + $0x38] sm:$0xff]
    %v50 = vld [vmem:[#allocation5 + $0x40] sm:$0xff]
    %v51 = vld [vmem:[#allocation5 + $0x48] sm:$0xff]
    %v52 = vld [vmem:[#allocation5 + $0x50] sm:$0xff]
    %v53 = vld [vmem:[#allocation5 + $0x58] sm:$0xff]
    %v54 = vld [vmem:[#allocation5 + $0x60] sm:$0xff]
    %v55 = vld [vmem:[#allocation5 + $0x68] sm:$0xff]
    %v56 = vld [vmem:[#allocation5 + $0x70] sm:$0xff]
    %v57 = vld [vmem:[#allocation5 + $0x78] sm:$0xff]
    %v58 = vld [vmem:[%s2] sm:$0x1]
    %v60 = vlaneseq
    %v61 = vshrl.u32 %v60, 7
    %v62 = vsub.s32 0, %v61
    %v63 = vrot.slane %v58, %v62
    %65 = vmatprep.subr.mxu0 0.0
    %66 = vmatpush1.msra.mxu0 %v57
    %67 = vmatprep.subr.mxu0 0.0
    %68 = vmatpush1.msra.mxu0 %v56
    %69 = vmatprep.subr.mxu0 0.0
    %70 = vmatpush1.msra.mxu0 %v55
    %71 = vmatprep.subr.mxu0 0.0
    %72 = vmatpush1.msra.mxu0 %v54
    %73 = vmatprep.subr.mxu0 0.0
    %74 = vmatpush1.msra.mxu0 %v53
    %75 = vmatprep.subr.mxu0 0.0
    %76 = vmatpush1.msra.mxu0 %v52
    %77 = vmatprep.subr.mxu0 0.0
    %78 = vmatpush1.msra.mxu0 %v51
    %79 = vmatprep.subr.mxu0 0.0
    %80 = vmatpush1.msra.mxu0 %v50
    %81 = vmatprep.subr.mxu0 0.0
    %82 = vmatpush1.msra.mxu0 %v49
    %83 = vmatprep.subr.mxu0 0.0
    %84 = vmatpush1.msra.mxu0 %v48
    %85 = vmatprep.subr.mxu0 0.0
    %86 = vmatpush1.msra.mxu0 %v47
    %87 = vmatprep.subr.mxu0 0.0
    %88 = vmatpush1.msra.mxu0 %v46
    %89 = vmatprep.subr.mxu0 0.0
    %90 = vmatpush1.msra.mxu0 %v45
    %91 = vmatprep.subr.mxu0 0.0
    %92 = vmatpush1.msra.mxu0 %v44
    %93 = vmatprep.subr.mxu0 0.0
    %94 = vmatpush1.msra.mxu0 %v43
    %95 = vmatprep.subr.mxu0 0.0
    %96 = vmatpush1.msra.mxu0 %v42
    %97 = vmatprep.subr.mxu0 0.0
    %98 = vmatpush2.msra.mxu0 0.0
    %99 = vmatprep.subr.mxu0 0.0
    %100 = vmatpush2.msra.mxu0 0.0
    %101 = vmatprep.subr.mxu0 0.0
    %102 = vmatpush2.msra.mxu0 0.0
    %103 = vmatprep.subr.mxu0 0.0
    %104 = vmatpush2.msra.mxu0 0.0
    %105 = vmatprep.subr.mxu0 0.0
    %106 = vmatpush2.msra.mxu0 0.0
    %107 = vmatprep.subr.mxu0 0.0
    %108 = vmatpush2.msra.mxu0 0.0
    %109 = vmatprep.subr.mxu0 0.0
    %110 = vmatpush2.msra.mxu0 0.0
    %111 = vmatprep.subr.mxu0 0.0
    %112 = vmatpush2.msra.mxu0 0.0
    %113 = vmatprep.subr.mxu0 0.0
    %114 = vmatpush2.msra.mxu0 0.0
    %115 = vmatprep.subr.mxu0 0.0
    %116 = vmatpush2.msra.mxu0 0.0
    %117 = vmatprep.subr.mxu0 0.0
    %118 = vmatpush2.msra.mxu0 0.0
    %119 = vmatprep.subr.mxu0 0.0
    %120 = vmatpush2.msra.mxu0 0.0
    %121 = vmatprep.subr.mxu0 0.0
    %122 = vmatpush2.msra.mxu0 0.0
    %123 = vmatprep.subr.mxu0 0.0
    %124 = vmatpush2.msra.mxu0 0.0
    %125 = vmatprep.subr.mxu0 0.0
    %126 = vmatpush2.msra.mxu0 0.0
    %127 = vmatprep.subr.mxu0 0.0
    %128 = vmatpush2.msra.mxu0 0.0
    %129 = vmatprep.mubr.f32.mxu0 0.0
    %130 = vmatmul.mubr.f32.gmra.mxu0 %v41
    %v131 = vpop.f32.mrf.mxu0
    %v132 = vadd.f32 %v63, %v131
    %v133 = vpop.f32.mrf.mxu0
    %134 = vdwg.mxu0
    %135 = vst [vmem:[#allocation7] sm:$0xff] %v132
    // Predicated region
    $region22: #{tpu_custom_call.1} parent=1 // pred_check
      _
    $region23: #{tpu_custom_call.1} parent=1 // pred_check_branch
      %137 = sbr.rel (0) target = $region25
    $region24: #{tpu_custom_call.1} parent=1 // pred_region
      %s139 = ssub.s32 128, 128
      %140 = vsyncadd [#allocation4], %s139
      %s142 = sshll.u32 [#allocation7], 4
      %s143 = int_to_ptr.vmem [resolvable:$true] %s142
      %145 = dma.vmem_to_hbm [thread:$0]  %s143, 128, %s3, [#allocation4]
    $region25: #{tpu_custom_call.1} parent=1 // pred_fallthru
      _
    // Predicated region
    $region26: #{tpu_custom_call.1} parent=1 // pred_check
      _
    $region27: #{tpu_custom_call.1} parent=1 // pred_check_branch
      %147 = sbr.rel (0) target = $region29
    $region28: #{tpu_custom_call.1} parent=1 // pred_region
      %148 = dma.done [#allocation4], 128
    $region29: #{tpu_custom_call.1} parent=1 // pred_fallthru
      _
    %149 = vsyncpa [#allocation3], 1
    %150 = vsyncpa [#allocation6], 1
    %151 = vsyncpa [#allocation4], 1

</llo_original>
